<compile_context>
chip_gen: v7x
topology: tpu7x:2x2x1
jax: 0.10.0
libtpu: 0.0.40
codegen_flags: <defaults>
</compile_context>

<pallas_src>
import jax
import jax.numpy as jnp
import numpy as np
from jax.experimental import pallas as pl
from jax.experimental.pallas import tpu as pltpu


# ----------------------------------------------------------------------------
# Kernel body: pure VPU elementwise math on one (br, lw) tile.
# ----------------------------------------------------------------------------
def _h_swish_kernel(x_ref, o_ref):
    x = x_ref[...]
    # h_sigmoid(x) = relu6(x + 3) / 6 ; h_swish(x) = x * h_sigmoid(x)
    gate = jnp.clip(x + 3.0, 0.0, 6.0) / 6.0
    o_ref[...] = (x * gate).astype(o_ref.dtype)


# ----------------------------------------------------------------------------
# Wrapper / tiling
# ----------------------------------------------------------------------------
BR_MAX = 512  # 512x1024 f32 = 2 MiB/block; 2x(in+out) = 8 MiB pipelined VMEM.
              # Safe on v5e (16 MiB scoped default) and v7x (64 MiB physical),
              # ~85% of HBM roofline on v6e.


def _round_up(a, b):
    return (a + b - 1) // b * b


def _pick_block_rows(rows):
    """Block row count: multiple of 8 (or full dim), >=2 grid steps when possible."""
    if rows < 16:
        return rows  # single full-dims block (legal even if rows % 8 != 0)
    # Split roughly in half (rounded up to a multiple of 8) so v7x's two
    # TensorCores both get work, capped at BR_MAX for large tensors.
    half = _round_up((rows + 1) // 2, 8)
    return min(BR_MAX, half)


def _h_swish_2d(x2d):
    """Run the Pallas kernel over a lane-dense (rows, lw) view."""
    rows, lw = x2d.shape
    br = _pick_block_rows(rows)
    grid = pl.cdiv(rows, br)  # partial last block is masked by Pallas
    return pl.pallas_call(
        _h_swish_kernel,
        out_shape=jax.ShapeDtypeStruct((rows, lw), x2d.dtype),
        grid_spec=pltpu.PrefetchScalarGridSpec(
            num_scalar_prefetch=0,
            grid=(grid,),
            in_specs=[pl.BlockSpec((br, lw), lambda i: (i, 0))],
            out_specs=pl.BlockSpec((br, lw), lambda i: (i, 0)),
        ),
        compiler_params=pltpu.CompilerParams(
            dimension_semantics=("parallel",)),
    )(x2d)


def _h_swish_jnp(x):
    """Tiny-tail fallback (fused by XLA)."""
    return x * (jnp.clip(x + 3.0, 0.0, 6.0) / 6.0)


def h_swish_pallas(x):
    """Elementwise h_swish on a tensor of any shape / layout (e.g. NCHW)."""
    orig_shape = x.shape
    flat = x.reshape(-1)  # free, row-major
    n = flat.shape[0]

    if n == 0:
        return x

    # Widest lane-dense width that divides n exactly -> zero-copy 2-D view.
    lw = None
    for cand in (1024, 512, 256, 128):
        if n % cand == 0:
            lw = cand
            break

    if lw is not None:
        out2d = _h_swish_2d(flat.reshape(n // lw, lw))
        return out2d.reshape(orig_shape)

    # Rare unaligned case (n % 128 != 0): kernel over the 128-aligned prefix,
    # <128-element tail in plain jnp.
    n_main = (n // 128) * 128
    if n_main == 0:
        return _h_swish_jnp(flat).reshape(orig_shape)
    main = jax.lax.slice(flat, (0,), (n_main,)).reshape(n_main // 128, 128)
    main_out = _h_swish_2d(main).reshape(-1)
    tail_out = _h_swish_jnp(flat[n_main:])
    return jnp.concatenate([main_out, tail_out]).reshape(orig_shape)


def h_swish_reference(x):
    """Pure-JAX reference mirroring the PyTorch module: x * (relu6(x+3)/6)."""
    return x * (jnp.clip(x + 3.0, 0.0, 6.0) / 6.0)


if __name__ == "__main__":
    # Small NCHW input consistent with the PyTorch module's typical usage.
    B, C, H, W = 2, 4, 16, 16
    key = jax.random.PRNGKey(0)
    x = jax.random.normal(key, (B, C, H, W), dtype=jnp.float32) * 4.0

    out = h_swish_pallas(x)
    out = jax.block_until_ready(out)

    ref = h_swish_reference(x)
    np.testing.assert_allclose(np.asarray(out), np.asarray(ref),
                               rtol=1e-6, atol=1e-6)

    print("KERNEL_OK")
</pallas_src>

<mosaic_0001>
module attributes {stable_mosaic.version = 11 : i64} {
  func.func @_h_swish_kernel(%arg0: i32, %arg1: memref<2x1024xf32, #tpu.memory_space<vmem>>, %arg2: memref<2x1024xf32, #tpu.memory_space<vmem>>) attributes {dimension_semantics = [#tpu.dimension_semantics<parallel>], iteration_bounds = array<i64: 1>, scalar_prefetch = 0 : i64, scratch_operands = 0 : i64, tpu.core_type = #tpu.core_type<tc>, window_params = [{transform_indices = @transform_0, window_bounds = array<i64: 2, 1024>}, {transform_indices = @transform_1, window_bounds = array<i64: 2, 1024>}]} {
    %c0 = arith.constant 0 : index
    %c0_0 = arith.constant 0 : index
    %0 = vector.load %arg1[%c0, %c0_0] : memref<2x1024xf32, #tpu.memory_space<vmem>>, vector<2x1024xf32>
    %cst = arith.constant 3.000000e+00 : f32
    %1 = vector.broadcast %cst : f32 to vector<2x1024xf32>
    %2 = arith.addf %0, %1 : vector<2x1024xf32>
    %cst_1 = arith.constant 0.000000e+00 : f32
    %cst_2 = arith.constant 6.000000e+00 : f32
    %3 = vector.broadcast %cst_1 : f32 to vector<2x1024xf32>
    %4 = arith.maximumf %3, %2 : vector<2x1024xf32>
    %5 = vector.broadcast %cst_2 : f32 to vector<2x1024xf32>
    %6 = arith.minimumf %5, %4 : vector<2x1024xf32>
    %cst_3 = arith.constant 6.000000e+00 : f32
    %7 = vector.broadcast %cst_3 : f32 to vector<2x1024xf32>
    %8 = arith.divf %6, %7 : vector<2x1024xf32>
    %9 = arith.mulf %0, %8 : vector<2x1024xf32>
    %c0_4 = arith.constant 0 : index
    %c0_5 = arith.constant 0 : index
    %10 = vector.load %arg2[%c0_4, %c0_5] : memref<2x1024xf32, #tpu.memory_space<vmem>>, vector<2x1024xf32>
    tpu.vector_store %arg2[%c0_4, %c0_5], %9 {strides = array<i32>} : memref<2x1024xf32, #tpu.memory_space<vmem>>, vector<2x1024xf32>,
    return
  }
  func.func @transform_0(%arg0: i32) -> (i32, i32) {
    %c0_i32 = arith.constant 0 : i32
    %c0_i32_0 = arith.constant 0 : i32
    return %arg0, %c0_i32 : i32, i32
  }
  func.func @transform_1(%arg0: i32) -> (i32, i32) {
    %c0_i32 = arith.constant 0 : i32
    %c0_i32_0 = arith.constant 0 : i32
    return %arg0, %c0_i32 : i32, i32
  }
}

</mosaic_0001>

<llo_original>
// kernel: tpu_custom_call.1
$region0: #{tpu_custom_call.1}
  #allocation0 [shape = 'u32[]', space=smem, size = 0x4, offset = 0x4, fixed_abs, tag = 'smem constant byte address 0x4 - core index']
  #allocation1 [shape = 'u32[144,128]{1,0:T(1,128)}', space=vmem, size = 0x12000, scoped, tag = 'internal scratch']
  %s0 = inlined_call_operand.hbm [shape: f32[2,1024], index: 0, kind: input, shape index: {}]
  %s1 = inlined_call_operand.hbm [shape: f32[2,1024], index: 1, kind: output, shape index: {}]
  %s2 = sld [smem:[#allocation0]]
  $region18: #{tpu_custom_call.1} parent=0
    _
  %s4 = ssub.s32 1, %s2
  %s5 = scalar_select 0, %s4, %s2
  $region1: #{tpu_custom_call.1} parent=0
    #allocation2 [shape = 'u8[8192]{0}', space=vmem, size = 0x2000, scoped, tag = 'input window, operand 0, single buffered']
    #allocation3 [shape = 's32[1]{0}', space=sflag, size = 0x4, scoped, tag = 'scoped memory for tpu_custom_call.1']
    #allocation4 [shape = 's32[1]{0}', space=sflag, size = 0x4, scoped, tag = 'scoped memory for tpu_custom_call.1']
    #allocation5 [shape = 'u8[8192]{0}', space=vmem, size = 0x2000, scoped, tag = 'output window, operand 0, single buffered']
    %6 = vsyncpa [#allocation3], 0
    %7 = vsyncpa [#allocation4], 0
    // Predicated region
    $region2: #{tpu_custom_call.1} parent=1 // pred_check
      _
    $region3: #{tpu_custom_call.1} parent=1 // pred_check_branch
      %9 = sbr.rel (0) target = $region5
    $region4: #{tpu_custom_call.1} parent=1 // pred_region
      %s11 = ssub.s32 256, 256
      %12 = vsyncadd [#allocation3], %s11
      %s14 = sshll.u32 [#allocation2], 4
      %s15 = int_to_ptr.vmem [resolvable:$true] %s14
      %17 = dma.hbm_to_vmem [thread:$0]  %s0, 256, %s15, [#allocation3]
    $region5: #{tpu_custom_call.1} parent=1 // pred_fallthru
      _
    // Predicated region
    $region6: #{tpu_custom_call.1} parent=1 // pred_check
      _
    $region7: #{tpu_custom_call.1} parent=1 // pred_check_branch
      %19 = sbr.rel (0) target = $region9
    $region8: #{tpu_custom_call.1} parent=1 // pred_region
      %20 = dma.done [#allocation3], 256
    $region9: #{tpu_custom_call.1} parent=1 // pred_fallthru
      _
    %v21 = vld [vmem:[#allocation2] sm:$0xff]
    %v22 = vld [vmem:[#allocation2 + $0x8] sm:$0xff]
    %v23 = vadd.f32 %v21, 3.0
    %v24 = vadd.f32 %v22, 3.0
    %v25 = vmax.f32 %v23, 0.0
    %v26 = vmax.f32 %v24, 0.0
    %v27 = vmin.f32 %v25, 6.0
    %v28 = vmin.f32 %v26, 6.0
    %v29 = vrcp.pop 6.0
    %v30 = vmul.f32 %v27, %v29
    %v31 = vmul.f32 %v28, %v29
    %v32 = vmul.f32 %v21, %v30
    %v33 = vmul.f32 %v22, %v31
    %34 = vst [vmem:[#allocation5] sm:$0xff] %v32
    %35 = vst [vmem:[#allocation5 + $0x8] sm:$0xff] %v33
    // Predicated region
    $region10: #{tpu_custom_call.1} parent=1 // pred_check
      _
    $region11: #{tpu_custom_call.1} parent=1 // pred_check_branch
      %37 = sbr.rel (0) target = $region13
    $region12: #{tpu_custom_call.1} parent=1 // pred_region
      %s39 = ssub.s32 256, 256
      %40 = vsyncadd [#allocation4], %s39
      %s42 = sshll.u32 [#allocation5], 4
      %s43 = int_to_ptr.vmem [resolvable:$true] %s42
      %45 = dma.vmem_to_hbm [thread:$0]  %s43, 256, %s1, [#allocation4]
    $region13: #{tpu_custom_call.1} parent=1 // pred_fallthru
      _
    // Predicated region
    $region14: #{tpu_custom_call.1} parent=1 // pred_check
      _
    $region15: #{tpu_custom_call.1} parent=1 // pred_check_branch
      %47 = sbr.rel (0) target = $region17
    $region16: #{tpu_custom_call.1} parent=1 // pred_region
      %48 = dma.done [#allocation4], 256
    $region17: #{tpu_custom_call.1} parent=1 // pred_fallthru
      _
    %49 = vsyncpa [#allocation3], 1
    %50 = vsyncpa [#allocation4], 1

</llo_original>
